<compile_context>
chip_gen: v5e
topology: v5e:2x2
jax: 0.10.0
libtpu: 0.0.40
codegen_flags: <defaults>
</compile_context>

<pallas_src>
import jax
import jax.numpy as jnp
import numpy as np
from jax.experimental import pallas as pl
from jax.experimental.pallas import tpu as pltpu

LANE = 128  # vreg lane width (fast axis)


def _mul_kernel(x1_ref, x2_ref, o_ref):
    # Whole-tile elementwise multiply: one vld per input, one unmasked vst.
    o_ref[...] = x1_ref[...] * x2_ref[...]


def _packed_tile_rows(dtype):
    """Native packed-tile height: 8 sublanes x (4 / itemsize) packed rows."""
    itemsize = jnp.dtype(dtype).itemsize
    return max(8, 8 * (4 // max(itemsize, 1)))  # f32 -> 8, bf16 -> 16, int8/fp8 -> 32


def _default_max_block_rows(itemsize):
    """Per-generation block-size target (bytes per operand block)."""
    kind = ""
    try:
        kind = jax.devices()[0].device_kind.lower()
    except Exception:
        pass
    if ("v5e" in kind) or ("v5 lite" in kind) or ("v5lite" in kind):
        # v5e: 16 MiB default scoped-VMEM limit; 3 operands x 2 buffers x 2 MiB = 12 MiB.
        target_bytes = 2 << 20
    else:
        # v6e / v7x: 32 MiB default scoped-VMEM limit; 3 x 2 x 4 MiB = 24 MiB.
        target_bytes = 4 << 20
    return max(8, target_bytes // (LANE * itemsize))


def shortcut_elementwise_multiply(x1, x2, *, max_block_rows=None,
                                  min_pallas_bytes=1 << 20):
    """Elementwise multiply of two same-shaped tensors via a Pallas TPU kernel."""
    assert x1.shape == x2.shape, "Input tensors must have the same shape"
    assert x1.dtype == x2.dtype, "Input tensors must have the same dtype"

    orig_shape = x1.shape
    n = x1.size
    itemsize = jnp.dtype(x1.dtype).itemsize

    # Fallback for tiny or lane-ragged inputs: a fused XLA multiply is already
    # at the HBM roofline, and pad/slice copies around the opaque pallas_call
    # would only add traffic (launch overhead dominates tiny tensors anyway).
    if n == 0 or n * itemsize < min_pallas_bytes or n % LANE != 0:
        return x1 * x2

    rows = n // LANE
    pack = _packed_tile_rows(x1.dtype)
    if max_block_rows is None:
        max_block_rows = _default_max_block_rows(itemsize)

    if rows <= max_block_rows:
        block_rows = rows  # single grid step, whole slab (full-extent block is always legal)
    else:
        # Keep block rows a multiple of the packed-tile height so every block
        # (except a possibly-partial last one) is full unmasked vregs.
        block_rows = max(pack, (max_block_rows // pack) * pack)

    grid = (pl.cdiv(rows, block_rows),)
    spec = pl.BlockSpec((block_rows, LANE), lambda i: (i, 0))

    # Contiguous reshape to a lane-dense (rows, 128) slab: a free bitcast,
    # no extra HBM traffic in or out of the kernel.
    x1_2d = x1.reshape(rows, LANE)
    x2_2d = x2.reshape(rows, LANE)

    out_2d = pl.pallas_call(
        _mul_kernel,
        out_shape=jax.ShapeDtypeStruct((rows, LANE), x1.dtype),
        grid_spec=pltpu.PrefetchScalarGridSpec(
            num_scalar_prefetch=0,
            grid=grid,
            in_specs=[spec, spec],
            out_specs=spec,
        ),
        compiler_params=pltpu.CompilerParams(
            # Independent row blocks: shard across the 2 TensorCores on v7x;
            # harmless on 1-TC v5e/v6e.
            # TODO(synk): if a v7x trace shows one TC idle, switch to pltpu.CORE_PARALLEL.
            dimension_semantics=("parallel",),
        ),
        cost_estimate=pl.CostEstimate(
            flops=n, transcendentals=0, bytes_accessed=3 * n * itemsize),
    )(x1_2d, x2_2d)

    return out_2d.reshape(orig_shape)


if __name__ == "__main__":
    key = jax.random.PRNGKey(0)
    k1, k2, k3, k4 = jax.random.split(key, 4)

    # Small shape consistent with the module: batch=2, channels=4, 16x16 spatial.
    shape = (2, 4, 16, 16)
    x1 = jax.random.normal(k1, shape, jnp.float32)
    x2 = jax.random.normal(k2, shape, jnp.float32)

    # Force the Pallas path for the small demo size (bypass the tiny-input fallback).
    out = jax.block_until_ready(
        shortcut_elementwise_multiply(x1, x2, min_pallas_bytes=0))
    ref = jax.block_until_ready(x1 * x2)
    assert out.shape == shape and out.dtype == x1.dtype
    assert np.allclose(np.asarray(out), np.asarray(ref), atol=1e-6, rtol=1e-6)

    # Second check: multi-block grid with a partial last block (520 rows, block 64).
    shape2 = (520, 128)
    y1 = jax.random.normal(k3, shape2, jnp.float32)
    y2 = jax.random.normal(k4, shape2, jnp.float32)
    out2 = jax.block_until_ready(
        shortcut_elementwise_multiply(y1, y2, min_pallas_bytes=0, max_block_rows=64))
    ref2 = jax.block_until_ready(y1 * y2)
    assert np.allclose(np.asarray(out2), np.asarray(ref2), atol=1e-6, rtol=1e-6)

    print("KERNEL_OK")
</pallas_src>

<mosaic_0001>
module attributes {stable_mosaic.version = 11 : i64} {
  func.func @_mul_kernel(%arg0: i32, %arg1: memref<16x128xf32, #tpu.memory_space<vmem>>, %arg2: memref<16x128xf32, #tpu.memory_space<vmem>>, %arg3: memref<16x128xf32, #tpu.memory_space<vmem>>) attributes {dimension_semantics = [#tpu.dimension_semantics<parallel>], iteration_bounds = array<i64: 1>, scalar_prefetch = 0 : i64, scratch_operands = 0 : i64, tpu.core_type = #tpu.core_type<tc>, window_params = [{transform_indices = @transform_0, window_bounds = array<i64: 16, 128>}, {transform_indices = @transform_1, window_bounds = array<i64: 16, 128>}, {transform_indices = @transform_2, window_bounds = array<i64: 16, 128>}]} {
    %c0 = arith.constant 0 : index
    %c0_0 = arith.constant 0 : index
    %0 = vector.load %arg1[%c0, %c0_0] : memref<16x128xf32, #tpu.memory_space<vmem>>, vector<16x128xf32>
    %c0_1 = arith.constant 0 : index
    %c0_2 = arith.constant 0 : index
    %1 = vector.load %arg2[%c0_1, %c0_2] : memref<16x128xf32, #tpu.memory_space<vmem>>, vector<16x128xf32>
    %2 = arith.mulf %0, %1 : vector<16x128xf32>
    %c0_3 = arith.constant 0 : index
    %c0_4 = arith.constant 0 : index
    %3 = vector.load %arg3[%c0_3, %c0_4] : memref<16x128xf32, #tpu.memory_space<vmem>>, vector<16x128xf32>
    tpu.vector_store %arg3[%c0_3, %c0_4], %2 {strides = array<i32>} : memref<16x128xf32, #tpu.memory_space<vmem>>, vector<16x128xf32>,
    return
  }
  func.func @transform_0(%arg0: i32) -> (i32, i32) {
    %c0_i32 = arith.constant 0 : i32
    %c0_i32_0 = arith.constant 0 : i32
    return %arg0, %c0_i32 : i32, i32
  }
  func.func @transform_1(%arg0: i32) -> (i32, i32) {
    %c0_i32 = arith.constant 0 : i32
    %c0_i32_0 = arith.constant 0 : i32
    return %arg0, %c0_i32 : i32, i32
  }
  func.func @transform_2(%arg0: i32) -> (i32, i32) {
    %c0_i32 = arith.constant 0 : i32
    %c0_i32_0 = arith.constant 0 : i32
    return %arg0, %c0_i32 : i32, i32
  }
}

</mosaic_0001>

<llo_original>
// kernel: tpu_custom_call.1
$region0: #{tpu_custom_call.1}
  #allocation0 [shape = 'u32[]', space=smem, size = 0x4, offset = 0x4, fixed_abs, tag = 'smem constant byte address 0x4 - core index']
  #allocation1 [shape = 'u32[72,128]{1,0:T(1,128)}', space=vmem, size = 0x9000, scoped, tag = 'internal scratch']
  %s0 = inlined_call_operand.hbm [shape: f32[16,128], index: 0, kind: input, shape index: {}]
  %s1 = inlined_call_operand.hbm [shape: f32[16,128], index: 1, kind: input, shape index: {}]
  %s2 = inlined_call_operand.hbm [shape: f32[16,128], index: 2, kind: output, shape index: {}]
  %s3 = sld [smem:[#allocation0]]
  $region26: #{tpu_custom_call.1} parent=0
    _
  %s5 = ssub.s32 1, %s3
  %s6 = scalar_select 0, %s5, %s3
  $region1: #{tpu_custom_call.1} parent=0
    #allocation2 [shape = 'u8[8192]{0}', space=vmem, size = 0x2000, scoped, tag = 'input window, operand 0, single buffered']
    #allocation3 [shape = 's32[1]{0}', space=sflag, size = 0x4, scoped, tag = 'scoped memory for tpu_custom_call.1']
    #allocation4 [shape = 's32[1]{0}', space=sflag, size = 0x4, scoped, tag = 'scoped memory for tpu_custom_call.1']
    #allocation5 [shape = 'u8[8192]{0}', space=vmem, size = 0x2000, scoped, tag = 'input window, operand 1, single buffered']
    #allocation6 [shape = 's32[1]{0}', space=sflag, size = 0x4, scoped, tag = 'scoped memory for tpu_custom_call.1']
    #allocation7 [shape = 'u8[8192]{0}', space=vmem, size = 0x2000, scoped, tag = 'output window, operand 0, single buffered']
    %7 = vsyncpa [#allocation3], 0
    %8 = vsyncpa [#allocation6], 0
    %9 = vsyncpa [#allocation4], 0
    // Predicated region
    $region2: #{tpu_custom_call.1} parent=1 // pred_check
      _
    $region3: #{tpu_custom_call.1} parent=1 // pred_check_branch
      %11 = sbr.rel (0) target = $region5
    $region4: #{tpu_custom_call.1} parent=1 // pred_region
      %13 = vsyncadd [#allocation3], 0
      %s14 = sshll.u32 %s0, 4
      %s15 = int_to_ptr.hbm [resolvable:$true] %s14
      %s16 = sshll.u32 [#allocation2], 4
      %s17 = int_to_ptr.vmem [resolvable:$true] %s16
      %22 = dma.hbm_to_vmem [thread:$0]  %s15, 256, %s17, [#allocation3], 128, 128, 8
    $region5: #{tpu_custom_call.1} parent=1 // pred_fallthru
      _
    // Predicated region
    $region6: #{tpu_custom_call.1} parent=1 // pred_check
      _
    $region7: #{tpu_custom_call.1} parent=1 // pred_check_branch
      %24 = sbr.rel (0) target = $region9
    $region8: #{tpu_custom_call.1} parent=1 // pred_region
      %26 = vsyncadd [#allocation6], 0
      %s27 = sshll.u32 %s1, 4
      %s28 = int_to_ptr.hbm [resolvable:$true] %s27
      %s29 = sshll.u32 [#allocation5], 4
      %s30 = int_to_ptr.vmem [resolvable:$true] %s29
      %35 = dma.hbm_to_vmem [thread:$0]  %s28, 256, %s30, [#allocation6], 128, 128, 8
    $region9: #{tpu_custom_call.1} parent=1 // pred_fallthru
      _
    // Predicated region
    $region10: #{tpu_custom_call.1} parent=1 // pred_check
      _
    $region11: #{tpu_custom_call.1} parent=1 // pred_check_branch
      %37 = sbr.rel (0) target = $region13
    $region12: #{tpu_custom_call.1} parent=1 // pred_region
      %39 = dma.done [#allocation3], 256
    $region13: #{tpu_custom_call.1} parent=1 // pred_fallthru
      _
    // Predicated region
    $region14: #{tpu_custom_call.1} parent=1 // pred_check
      _
    $region15: #{tpu_custom_call.1} parent=1 // pred_check_branch
      %41 = sbr.rel (0) target = $region17
    $region16: #{tpu_custom_call.1} parent=1 // pred_region
      %43 = dma.done [#allocation6], 256
    $region17: #{tpu_custom_call.1} parent=1 // pred_fallthru
      _
    %v44 = vld [vmem:[#allocation2] sm:$0xff]
    %v45 = vld [vmem:[#allocation2 + $0x8] sm:$0xff]
    %v46 = vld [vmem:[#allocation5] sm:$0xff]
    %v47 = vld [vmem:[#allocation5 + $0x8] sm:$0xff]
    %v48 = vmul.f32 %v44, %v46
    %v49 = vmul.f32 %v45, %v47
    %50 = vst [vmem:[#allocation7] sm:$0xff] %v48
    %51 = vst [vmem:[#allocation7 + $0x8] sm:$0xff] %v49
    // Predicated region
    $region18: #{tpu_custom_call.1} parent=1 // pred_check
      _
    $region19: #{tpu_custom_call.1} parent=1 // pred_check_branch
      %53 = sbr.rel (0) target = $region21
    $region20: #{tpu_custom_call.1} parent=1 // pred_region
      %55 = vsyncadd [#allocation4], 0
      %s56 = sshll.u32 [#allocation7], 4
      %s57 = int_to_ptr.vmem [resolvable:$true] %s56
      %s58 = sshll.u32 %s2, 4
      %s59 = int_to_ptr.hbm [resolvable:$true] %s58
      %64 = dma.vmem_to_hbm [thread:$0]  %s57, 256, %s59, [#allocation4], 128, 128, 8
    $region21: #{tpu_custom_call.1} parent=1 // pred_fallthru
      _
    // Predicated region
    $region22: #{tpu_custom_call.1} parent=1 // pred_check
      _
    $region23: #{tpu_custom_call.1} parent=1 // pred_check_branch
      %66 = sbr.rel (0) target = $region25
    $region24: #{tpu_custom_call.1} parent=1 // pred_region
      %68 = dma.done [#allocation4], 256
    $region25: #{tpu_custom_call.1} parent=1 // pred_fallthru
      _
    %69 = vsyncpa [#allocation3], 1
    %70 = vsyncpa [#allocation6], 1
    %71 = vsyncpa [#allocation4], 1

</llo_original>
